<compile_context>
chip_gen: v7x
topology: tpu7x:2x2x1
jax: 0.10.0
libtpu: 0.0.40
codegen_flags: <defaults>
</compile_context>

<pallas_src>
import numpy as np
import jax
import jax.numpy as jnp
from jax.experimental import pallas as pl
from jax.experimental.pallas import tpu as pltpu


# ---------------------------------------------------------------------------
# sincos positional embedding (numpy, identical math to the reference module)
# ---------------------------------------------------------------------------
def get_1d_sincos_pos_embed_from_grid_np(embed_dim, pos):
    assert embed_dim % 2 == 0
    omega = np.arange(embed_dim // 2, dtype=np.float64)
    omega /= embed_dim / 2.0
    omega = 1.0 / 10000 ** omega
    pos = pos.reshape(-1)
    out = np.einsum("m,d->md", pos, omega)
    return np.concatenate([np.sin(out), np.cos(out)], axis=1)


def get_2d_sincos_pos_embed_from_grid_np(embed_dim, grid):
    assert embed_dim % 2 == 0
    emb_h = get_1d_sincos_pos_embed_from_grid_np(embed_dim // 2, grid[0])
    emb_w = get_1d_sincos_pos_embed_from_grid_np(embed_dim // 2, grid[1])
    return np.concatenate([emb_h, emb_w], axis=1)


def get_2d_sincos_pos_embed_np(embed_dim, grid_size, interpolation_scale=1.0, base_size=16):
    if isinstance(grid_size, int):
        grid_size = (grid_size, grid_size)
    grid_h = np.arange(grid_size[0], dtype=np.float32) / (grid_size[0] / base_size) / interpolation_scale
    grid_w = np.arange(grid_size[1], dtype=np.float32) / (grid_size[1] / base_size) / interpolation_scale
    grid = np.meshgrid(grid_w, grid_h)  # xy indexing (numpy default)
    grid = np.stack(grid, axis=0)
    grid = grid.reshape([2, 1, grid_size[1], grid_size[0]])
    return get_2d_sincos_pos_embed_from_grid_np(embed_dim, grid)


# ---------------------------------------------------------------------------
# Pallas kernel: one (patch-tile, batch) block:  out = x @ W + (pos + bias)
# ---------------------------------------------------------------------------
def patch_embed_kernel(x_ref, w_ref, posb_ref, o_ref):
    # x_ref:    (1, TN, K)   TN flattened patches of one batch element
    # w_ref:    (K, Ep)      conv weight (constant index -> VMEM-resident)
    # posb_ref: (TN, Ep)     f32 pos_embed + bias (constant across inner batch axis)
    # o_ref:    (1, TN, Ep)
    y = jnp.dot(x_ref[0], w_ref[...], preferred_element_type=jnp.float32)
    y = y + posb_ref[...]
    o_ref[0] = y.astype(o_ref.dtype)


def _round_up(x, m):
    return ((x + m - 1) // m) * m


def _vmem_capacity_bytes():
    """Per-TensorCore VMEM capacity; conservative fallback if query unavailable."""
    try:
        info = pltpu.get_tpu_info()
        cap = getattr(info, "vmem_capacity_bytes", None)
        if cap:
            return int(cap)
    except Exception:
        pass
    return 64 << 20  # v7x per-TC (worst case)


def patch_embed_forward(latent, weight, bias, pos_embed, *, patch_size, matmul_dtype=None):
    """latent: (B, C, H, W) NCHW.  weight: (E, C, p, p).  bias: (E,).
    pos_embed: (num_patches, E).  Returns (B, num_patches, E) in latent.dtype.

    matmul_dtype: optional (e.g. jnp.bfloat16) storage/matmul dtype for x and W.
    Default None keeps the module's exact dtype semantics (accumulation is f32
    either way)."""
    B, C, H, W = latent.shape
    p = patch_size
    Hp, Wp = H // p, W // p
    NP = Hp * Wp
    E = weight.shape[0]
    K = C * p * p
    out_dtype = latent.dtype
    mm_dtype = jnp.dtype(matmul_dtype) if matmul_dtype is not None else jnp.dtype(out_dtype)
    x_it = mm_dtype.itemsize
    o_it = jnp.dtype(out_dtype).itemsize

    # Lane-dense output: pad embed dim to a multiple of 128 (real ViT dims already are).
    Ep = _round_up(E, 128)

    # --- generation-aware VMEM budget & honest per-step accounting -----------------
    vmem_cap = _vmem_capacity_bytes()                       # 128 MiB v5e/v6e, 64 MiB v7x
    budget = max(4 << 20, min(vmem_cap // 6, 24 << 20))     # ~21 MiB v5e/v6e, ~10 MiB v7x
    fixed = 2 * K * Ep * x_it                               # weight (default double-buffered)
    per_tn = (2 * K * x_it          # x tile, double-buffered
              + 2 * Ep * 4          # posb tile (f32), double-buffered
              + 2 * Ep * o_it       # out tile, double-buffered
              + Ep * 4)             # f32 dot intermediate / accumulator
    # Sublane multiple for the packed row dim: 8 (f32) / 16 (bf16) / 32 (int8/fp8).
    sub = 32 // min(x_it, o_it)

    tn_cap = max(sub, min((budget - fixed) // per_tn, 1024))
    if NP <= tn_cap:
        TN, NPp = NP, NP                       # whole patch axis in one (full-dim) block
    else:
        tn_cap = (tn_cap // sub) * sub
        # Prefer a divisor of NP: no x pad, no trailing HBM->HBM slice of the output.
        TN = 0
        t = tn_cap
        while t >= sub:
            if NP % t == 0:
                TN = t
                break
            t -= sub
        if TN == 0 or (TN < 256 and TN * 2 <= tn_cap):
            TN = tn_cap                        # fall back to padding (keeps MXU tiles big)
        NPp = _round_up(NP, TN)

    # --- glue: patch extraction (layout-only; fuses into one XLA copy under jit) ---
    x = latent.reshape(B, C, Hp, p, Wp, p)
    x = jnp.transpose(x, (0, 2, 4, 1, 3, 5)).reshape(B, NP, K)          # (B, NP, K)
    x = x.astype(mm_dtype)
    if NPp != NP:
        x = jnp.pad(x, ((0, 0), (0, NPp - NP), (0, 0)))

    # Fold bias into the positional embedding; keep in f32 (tiny, avoids double rounding).
    posb = pos_embed.astype(jnp.float32) + bias.astype(jnp.float32)[None, :]   # (NP, E)
    posb = jnp.pad(posb, ((0, NPp - NP), (0, Ep - E)))                         # (NPp, Ep) f32

    w = weight.reshape(E, K).T.astype(mm_dtype)                                # (K, E)
    w = jnp.pad(w, ((0, 0), (0, Ep - E)))                                      # (K, Ep)

    # Grid: (patch tiles, batch) -- batch innermost so posb's block index is constant
    # across consecutive steps (fetched once per tile, not once per batch element).
    grid = (NPp // TN, B)

    flops = 2 * B * NPp * K * E
    bytes_accessed = int(x.size * x_it + w.size * x_it + posb.size * 4 + B * NPp * Ep * o_it)

    # Always set the scoped-VMEM limit explicitly (v5e default is only 16 MiB) but keep
    # it within 3/4 of physical capacity: ~48 MiB on v7x, ~96 MiB on v5e/v6e.
    est_vmem = fixed + TN * per_tn
    vmem_limit = int(min(max(2 * est_vmem, 32 << 20), (vmem_cap * 3) // 4))

    out = pl.pallas_call(
        patch_embed_kernel,
        out_shape=jax.ShapeDtypeStruct((B, NPp, Ep), out_dtype),
        grid_spec=pltpu.PrefetchScalarGridSpec(
            num_scalar_prefetch=0,
            grid=grid,
            in_specs=[
                pl.BlockSpec((1, TN, K), lambda n, b: (b, n, 0)),   # patches
                pl.BlockSpec((K, Ep), lambda n, b: (0, 0)),         # weight, VMEM-resident
                pl.BlockSpec((TN, Ep), lambda n, b: (n, 0)),        # pos+bias, batch-shared
            ],
            out_specs=pl.BlockSpec((1, TN, Ep), lambda n, b: (b, n, 0)),
        ),
        compiler_params=pltpu.CompilerParams(
            dimension_semantics=("parallel", "parallel"),
            vmem_limit_bytes=vmem_limit,
        ),
        cost_estimate=pl.CostEstimate(
            flops=flops, transcendentals=0, bytes_accessed=bytes_accessed),
    )(x, w, posb)

    # Identity (elided under jit) when NPp == NP and Ep == E (real ViT dims).
    return out[:, :NP, :E]


# ---------------------------------------------------------------------------
# main
# ---------------------------------------------------------------------------
if __name__ == "__main__":
    # Small shapes consistent with the module:
    #   height = width = 16, patch_size = 8, in_channels = 4, embed_dim = 32
    B, C, H, W = 2, 4, 16, 16
    patch_size = 8
    embed_dim = 32

    Hp, Wp = H // patch_size, W // patch_size
    num_patches = Hp * Wp
    base_size = H // patch_size            # as in PatchEmbed.__init__
    grid_size = int(num_patches ** 0.5)    # pos_embed_max_size is None (assumes Hp == Wp,
                                           # exactly like the reference module)

    key = jax.random.PRNGKey(0)
    k_x, k_w, k_b = jax.random.split(key, 3)
    latent = jax.random.normal(k_x, (B, C, H, W), dtype=jnp.float32)
    weight = jax.random.normal(k_w, (embed_dim, C, patch_size, patch_size), dtype=jnp.float32) * 0.02
    bias = jax.random.normal(k_b, (embed_dim,), dtype=jnp.float32) * 0.02

    # Precomputed (buffer-like) sincos pos embedding, identical to register_buffer path.
    pos_embed = jnp.asarray(
        get_2d_sincos_pos_embed_np(embed_dim, grid_size,
                                   interpolation_scale=1.0, base_size=base_size),
        dtype=jnp.float32,
    )  # (num_patches, embed_dim)

    fwd = jax.jit(patch_embed_forward, static_argnames=("patch_size", "matmul_dtype"))
    out = fwd(latent, weight, bias, pos_embed, patch_size=patch_size)
    out = jax.block_until_ready(out)

    # Reference check with plain JAX conv (strided conv == patchify matmul).
    ref_conv = jax.lax.conv_general_dilated(
        latent, weight,
        window_strides=(patch_size, patch_size),
        padding="VALID",
        dimension_numbers=("NCHW", "OIHW", "NCHW"),
    ) + bias.reshape(1, embed_dim, 1, 1)
    ref = jnp.transpose(ref_conv.reshape(B, embed_dim, num_patches), (0, 2, 1))
    ref = ref + pos_embed[None, :, :]

    assert out.shape == (B, num_patches, embed_dim)
    np.testing.assert_allclose(np.asarray(out), np.asarray(ref), rtol=1e-4, atol=1e-4)

    print("KERNEL_OK")
</pallas_src>

<mosaic_0001>
module attributes {stable_mosaic.version = 11 : i64} {
  func.func @patch_embed_kernel(%arg0: i32, %arg1: i32, %arg2: memref<1x4x256xf32, #tpu.memory_space<vmem>>, %arg3: memref<256x128xf32, #tpu.memory_space<vmem>>, %arg4: memref<4x128xf32, #tpu.memory_space<vmem>>, %arg5: memref<1x4x128xf32, #tpu.memory_space<vmem>>) attributes {dimension_semantics = [#tpu.dimension_semantics<parallel>, #tpu.dimension_semantics<parallel>], iteration_bounds = array<i64: 1, 2>, scalar_prefetch = 0 : i64, scratch_operands = 0 : i64, tpu.core_type = #tpu.core_type<tc>, window_params = [{transform_indices = @transform_0, window_bounds = array<i64: 1, 4, 256>}, {pipeline_mode = #tpu.pipeline_mode<synchronous>, transform_indices = @transform_1, window_bounds = array<i64: 256, 128>}, {transform_indices = @transform_2, window_bounds = array<i64: 4, 128>}, {transform_indices = @transform_3, window_bounds = array<i64: 1, 4, 128>}]} {
    %c0 = arith.constant 0 : index
    %c0_0 = arith.constant 0 : index
    %c0_1 = arith.constant 0 : index
    %0 = vector.load %arg2[%c0, %c0_0, %c0_1] : memref<1x4x256xf32, #tpu.memory_space<vmem>>, vector<1x4x256xf32>
    %1 = vector.shape_cast %0 : vector<1x4x256xf32> to vector<4x256xf32>
    %c0_2 = arith.constant 0 : index
    %c0_3 = arith.constant 0 : index
    %2 = vector.load %arg3[%c0_2, %c0_3] : memref<256x128xf32, #tpu.memory_space<vmem>>, vector<256x128xf32>
    %cst = arith.constant dense<0.000000e+00> : vector<4x128xf32>
    %3 = tpu.matmul %1, %2, %cst {dimension_numbers = #tpu.dot_dimension_numbers<[1], [0], [0], [1], [0, 0, 1, 1], [], []>} : vector<4x256xf32>, vector<256x128xf32>, vector<4x128xf32> -> vector<4x128xf32>
    %c0_4 = arith.constant 0 : index
    %c0_5 = arith.constant 0 : index
    %4 = vector.load %arg4[%c0_4, %c0_5] : memref<4x128xf32, #tpu.memory_space<vmem>>, vector<4x128xf32>
    %5 = arith.addf %3, %4 : vector<4x128xf32>
    %c0_6 = arith.constant 0 : index
    %c0_7 = arith.constant 0 : index
    %c0_8 = arith.constant 0 : index
    %6 = vector.load %arg5[%c0_6, %c0_7, %c0_8] : memref<1x4x128xf32, #tpu.memory_space<vmem>>, vector<1x4x128xf32>
    %7 = vector.shape_cast %6 : vector<1x4x128xf32> to vector<4x128xf32>
    %8 = vector.shape_cast %5 : vector<4x128xf32> to vector<1x4x128xf32>
    tpu.vector_store %arg5[%c0_6, %c0_7, %c0_8], %8 {strides = array<i32>} : memref<1x4x128xf32, #tpu.memory_space<vmem>>, vector<1x4x128xf32>,
    return
  }
  func.func @transform_0(%arg0: i32, %arg1: i32) -> (i32, i32, i32) {
    %c0_i32 = arith.constant 0 : i32
    %c0_i32_0 = arith.constant 0 : i32
    return %arg1, %arg0, %c0_i32 : i32, i32, i32
  }
  func.func @transform_1(%arg0: i32, %arg1: i32) -> (i32, i32) {
    %c0_i32 = arith.constant 0 : i32
    %c0_i32_0 = arith.constant 0 : i32
    %c0_i32_1 = arith.constant 0 : i32
    return %c0_i32, %c0_i32_0 : i32, i32
  }
  func.func @transform_2(%arg0: i32, %arg1: i32) -> (i32, i32) {
    %c0_i32 = arith.constant 0 : i32
    %c0_i32_0 = arith.constant 0 : i32
    return %arg0, %c0_i32 : i32, i32
  }
  func.func @transform_3(%arg0: i32, %arg1: i32) -> (i32, i32, i32) {
    %c0_i32 = arith.constant 0 : i32
    %c0_i32_0 = arith.constant 0 : i32
    return %arg1, %arg0, %c0_i32 : i32, i32, i32
  }
}

</mosaic_0001>

<llo_original>
// kernel: patch_embed_forward.1
$region0: #{patch_embed_forward.1}
  #allocation0 [shape = 'u32[]', space=smem, size = 0x4, offset = 0x4, fixed_abs, tag = 'smem constant byte address 0x4 - core index']
  #allocation1 [shape = 'u32[144,128]{1,0:T(1,128)}', space=vmem, size = 0x12000, scoped, tag = 'internal scratch']
  %s0 = inlined_call_operand.vmem [shape: f32[2,4,256], index: 0, kind: input, shape index: {}]
  %s1 = inlined_call_operand.vmem [shape: f32[256,128], index: 1, kind: input, shape index: {}]
  %s2 = inlined_call_operand.vmem [shape: f32[4,128], index: 2, kind: input, shape index: {}]
  %s3 = inlined_call_operand.hbm [shape: f32[2,4,128], index: 3, kind: output, shape index: {}]
  %s4 = sld [smem:[#allocation0]]
  $region45: #{patch_embed_forward.1} parent=0
    _
  %s6 = ssub.s32 1, %s4
  %s7 = scalar_select 0, %s6, %s4
  $region1: #{patch_embed_forward.1} parent=0
    #allocation2 [shape = 'u8[4096]{0}', space=vmem, size = 0x1000, scoped, tag = 'output window, operand 0']
    #allocation3 [shape = 's32[2]{0}', space=sflag, size = 0x8, scoped, tag = 'scoped memory for patch_embed_forward.1']
    %8 = vsyncpa [#allocation3], 0
    %s9 = scalar_lea.sflag [#allocation3], 1
    %10 = vsyncpa %s9, 0
    loop: start=0, step=1, limit=4
    $region2: #{patch_embed_forward.1} parent=1 // loop_pre_header
      _
    $region3: #{patch_embed_forward.1} parent=1 // loop_header
      %s12 = sphi 0, %s16
      %p13 = scmp.ge.s32.totalorder %s12, 4
      %s19 = sphi 0, %s31
      %s20 = sphi 0, %s27
      %s21 = sphi 0, %s19
      %s22 = sphi 0, %s20
      %s23 = sphi 0, %s21
      %s24 = sphi 0, %s22
      %s36 = sphi 0, %s38
      %s39 = sphi 0, %s36
      %s40 = sphi 0, %s39
      %s56 = sphi 0, %s40
      %s60 = sphi 0, %s60
      %s62 = sphi 0, %s60
      %s63 = sphi 0, %s62
      %s77 = sphi 0, %s63
      %s83 = sphi 0, %s85
      %s86 = sphi 0, %s83
      %s87 = sphi 0, %s86
      %s103 = sphi 0, %s87
      %s111 = sphi 0, %s113
      %s114 = sphi 0, %s111
      %s115 = sphi 0, %s114
      %s131 = sphi 0, %s115
    $region4: #{patch_embed_forward.1} parent=1 // loop_header_branch
      %15 = sbr.rel (%p13) target = $region8
    $region5: #{patch_embed_forward.1} parent=1 // loop_body
      %s17 = ssub.s32 %s12, 1
      %s18 = ssub.s32 %s12, 2
      %s25 = sadd.s32 1, %s20
      %p26 = scmp.ge.s32.totalorder %s25, 2
      %s27 = scalar_select %p26, 0, %s25
      %s28 = sadd.s32 1, %s19
      %s29 = scalar_select %p26, %s28, %s19
      %p30 = scmp.ge.s32.totalorder %s29, 1
      %s31 = scalar_select %p30, 0, %s29
      %s32 = ssub.s32 %s20, %s27
      %s33 = ssub.s32 %s19, %s31
      %s34 = sor.u32 %s32, %s33
      %p35 = scmp.eq.s32.totalorder %s34, 0
      %s37 = sadd.s32 %s36, 1
      %s38 = scalar_select %p35, %s36, %s37
      %p41 = pneg %p35
      %p42 = scmp.eq.s32.totalorder %s12, 1
      %p43 = por %p41, %p42
      %p44 = scmp.ne.s32.totalorder %s36, %s39
      %p45 = scmp.eq.s32.totalorder %s12, 0
      %p46 = por %p44, %p45
      %p47 = scmp.ne.s32.totalorder %s36, %s39
      %p48 = scmp.eq.s32.totalorder %s17, 1
      %p49 = por %p47, %p48
      %p50 = scmp.ne.s32.totalorder %s39, %s40
      %p51 = scmp.eq.s32.totalorder %s17, 0
      %p52 = por %p50, %p51
      %p53 = scmp.ne.s32.totalorder %s39, %s40
      %p54 = scmp.eq.s32.totalorder %s18, 1
      %p55 = por %p53, %p54
      %p57 = scmp.ne.s32.totalorder %s40, %s56
      %p58 = scmp.eq.s32.totalorder %s18, 0
      %p59 = por %p57, %p58
      %s61 = sadd.s32 %s60, 1
      %p64 = scmp.eq.s32.totalorder %s12, 1
      %p65 = scmp.ne.s32.totalorder %s60, %s62
      %p66 = scmp.eq.s32.totalorder %s12, 0
      %p67 = por %p65, %p66
      %p68 = scmp.ne.s32.totalorder %s60, %s62
      %p69 = scmp.eq.s32.totalorder %s17, 1
      %p70 = por %p68, %p69
      %p71 = scmp.ne.s32.totalorder %s62, %s63
      %p72 = scmp.eq.s32.totalorder %s17, 0
      %p73 = por %p71, %p72
      %p74 = scmp.ne.s32.totalorder %s62, %s63
      %p75 = scmp.eq.s32.totalorder %s18, 1
      %p76 = por %p74, %p75
      %p78 = scmp.ne.s32.totalorder %s63, %s77
      %p79 = scmp.eq.s32.totalorder %s18, 0
      %p80 = por %p78, %p79
      %s81 = ssub.s32 %s19, %s31
      %p82 = scmp.eq.s32.totalorder %s81, 0
      %s84 = sadd.s32 %s83, 1
      %s85 = scalar_select %p82, %s83, %s84
      %p88 = pneg %p82
      %p89 = scmp.eq.s32.totalorder %s12, 1
      %p90 = por %p88, %p89
      %p91 = scmp.ne.s32.totalorder %s83, %s86
      %p92 = scmp.eq.s32.totalorder %s12, 0
      %p93 = por %p91, %p92
      %p94 = scmp.ne.s32.totalorder %s83, %s86
      %p95 = scmp.eq.s32.totalorder %s17, 1
      %p96 = por %p94, %p95
      %p97 = scmp.ne.s32.totalorder %s86, %s87
      %p98 = scmp.eq.s32.totalorder %s17, 0
      %p99 = por %p97, %p98
      %p100 = scmp.ne.s32.totalorder %s86, %s87
      %p101 = scmp.eq.s32.totalorder %s18, 1
      %p102 = por %p100, %p101
      %p104 = scmp.ne.s32.totalorder %s87, %s103
      %p105 = scmp.eq.s32.totalorder %s18, 0
      %p106 = por %p104, %p105
      %s107 = ssub.s32 %s20, %s27
      %s108 = ssub.s32 %s19, %s31
      %s109 = sor.u32 %s107, %s108
      %p110 = scmp.eq.s32.totalorder %s109, 0
      %s112 = sadd.s32 %s111, 1
      %s113 = scalar_select %p110, %s111, %s112
      %p116 = pneg %p110
      %p117 = scmp.eq.s32.totalorder %s12, 1
      %p118 = por %p116, %p117
      %p119 = scmp.ne.s32.totalorder %s111, %s114
      %p120 = scmp.eq.s32.totalorder %s12, 0
      %p121 = por %p119, %p120
      %p122 = scmp.ne.s32.totalorder %s111, %s114
      %p123 = scmp.eq.s32.totalorder %s17, 1
      %p124 = por %p122, %p123
      %p125 = scmp.ne.s32.totalorder %s114, %s115
      %p126 = scmp.eq.s32.totalorder %s17, 0
      %p127 = por %p125, %p126
      %p128 = scmp.ne.s32.totalorder %s114, %s115
      %p129 = scmp.eq.s32.totalorder %s18, 1
      %p130 = por %p128, %p129
      %p132 = scmp.ne.s32.totalorder %s115, %s131
      %p133 = scmp.eq.s32.totalorder %s18, 0
      %p134 = por %p132, %p133
      %p135 = scmp.le.s32.totalorder 1, %s12
      %p136 = scmp.lt.s32.totalorder %s12, 3
      %p137 = pnand %p135, %p136
      %p138 = pneg %p137
      // Predicated region
      $region9: #{patch_embed_forward.1} parent=5 // pred_check
        _
      $region10: #{patch_embed_forward.1} parent=5 // pred_check_branch
        %140 = sbr.rel (%p137) target = $region12
      $region11: #{patch_embed_forward.1} parent=5 // pred_region
        %s141 = ssub.s32 %s12, 1
        // Predicated region
        $region13: #{patch_embed_forward.1} parent=11 // pred_check
          %p142 = pneg %p73
        $region14: #{patch_embed_forward.1} parent=11 // pred_check_branch
          %144 = sbr.rel (%p142) target = $region16
        $region15: #{patch_embed_forward.1} parent=11 // pred_region
          _
        $region16: #{patch_embed_forward.1} parent=11 // pred_fallthru
          _
        // Predicated region
        $region17: #{patch_embed_forward.1} parent=11 // pred_check
          %p145 = pneg %p99
        $region18: #{patch_embed_forward.1} parent=11 // pred_check_branch
          %147 = sbr.rel (%p145) target = $region20
        $region19: #{patch_embed_forward.1} parent=11 // pred_region
          %p148 = scmp.lt.s32.totalorder %s21, 0
          %s149 = scalar_select %p148, %s21, 0
          %s150 = smul.addr %s149, 4
          %s151 = scalar_lea.vmem %s2, %s150
        $region20: #{patch_embed_forward.1} parent=11 // pred_fallthru
          _
      $region12: #{patch_embed_forward.1} parent=5 // pred_fallthru
        _
      %p152 = scmp.lt.s32.totalorder %s12, 2
      // Predicated region
      $region21: #{patch_embed_forward.1} parent=5 // pred_check
        %p153 = pneg %p152
      $region22: #{patch_embed_forward.1} parent=5 // pred_check_branch
        %155 = sbr.rel (%p153) target = $region24
      $region23: #{patch_embed_forward.1} parent=5 // pred_region
        // Predicated region
        $region25: #{patch_embed_forward.1} parent=23 // pred_check
          %p156 = pneg %p46
        $region26: #{patch_embed_forward.1} parent=23 // pred_check_branch
          %158 = sbr.rel (%p156) target = $region28
        $region27: #{patch_embed_forward.1} parent=23 // pred_region
          %p159 = scmp.lt.s32.totalorder %s20, 1
          %s160 = scalar_select %p159, %s20, 1
          %p161 = scmp.lt.s32.totalorder %s19, 0
          %s162 = scalar_select %p161, %s19, 0
          %s163 = smul.addr %s162, 2
          %s164 = smul.addr %s160, 2
          %s165 = sadd.s32 %s163, %s164
          %s166 = smul.addr %s165, 4
          %s167 = scalar_lea.vmem %s0, %s166
        $region28: #{patch_embed_forward.1} parent=23 // pred_fallthru
          _
      $region24: #{patch_embed_forward.1} parent=5 // pred_fallthru
        _
      %p168 = scmp.le.s32.totalorder 1, %s12
      %p169 = scmp.lt.s32.totalorder %s12, 3
      %p170 = pnand %p168, %p169
      %p171 = pneg %p170
      // Predicated region
      $region29: #{patch_embed_forward.1} parent=5 // pred_check
        _
      $region30: #{patch_embed_forward.1} parent=5 // pred_check_branch
        %173 = sbr.rel (%p170) target = $region32
      $region31: #{patch_embed_forward.1} parent=5 // pred_region
        %s174 = ssub.s32 %s12, 1
        %p175 = scmp.lt.s32.totalorder %s22, 1
        %s176 = scalar_select %p175, %s22, 1
        %p177 = scmp.lt.s32.totalorder %s21, 0
        %s178 = scalar_select %p177, %s21, 0
        %s179 = smul.addr %s178, 2
        %s180 = smul.addr %s176, 2
        %s181 = sadd.s32 %s179, %s180
        %s182 = smul.addr %s181, 4
        %s183 = scalar_lea.vmem %s0, %s182
        %p184 = pneg %p52
        %p185 = pneg %p49
        %p186 = pneg %p73
        %p187 = pneg %p70
        %p188 = scmp.lt.s32.totalorder %s21, 0
        %s189 = scalar_select %p188, %s21, 0
        %s190 = smul.addr %s189, 4
        %s191 = scalar_lea.vmem %s2, %s190
        %p192 = pneg %p99
        %p193 = pneg %p96
        %p194 = pneg %p127
        %p195 = pneg %p124
        %s196 = sand.u32 %s114, 1
        %s197 = scalar_lea.sflag [#allocation3], %s196
        %s198 = sand.u32 %s114, 1
        %s199 = smul.addr %s198, 4
        %s200 = scalar_lea.vmem [#allocation2], %s199
        %p201 = scmp.lt.s32.totalorder %s22, 1
        %s202 = scalar_select %p201, %s22, 1
        %p203 = scmp.lt.s32.totalorder %s21, 0
        %s204 = scalar_select %p203, %s21, 0
        %s205 = smul.addr %s204, 2
        %s206 = smul.addr %s202, 2
        %s207 = sadd.s32 %s205, %s206
        %s208 = smul.addr %s207, 4
        %s209 = scalar_lea.vmem %s0, %s208
        %p210 = scmp.lt.s32.totalorder %s21, 0
        %s211 = scalar_select %p210, %s21, 0
        %s212 = smul.addr %s211, 4
        %s213 = scalar_lea.vmem %s2, %s212
        %v214 = vld [vmem:[%s209] sm:$0xff]
        %v215 = vld [vmem:[%s1] sm:$0xff]
        %v216 = vld [vmem:[%s1 + $0x8] sm:$0xff]
        %v217 = vld [vmem:[%s1 + $0x10] sm:$0xff]
        %v218 = vld [vmem:[%s1 + $0x18] sm:$0xff]
        %v219 = vld [vmem:[%s1 + $0x20] sm:$0xff]
        %v220 = vld [vmem:[%s1 + $0x28] sm:$0xff]
        %v221 = vld [vmem:[%s1 + $0x30] sm:$0xff]
        %v222 = vld [vmem:[%s1 + $0x38] sm:$0xff]
        %v223 = vld [vmem:[%s1 + $0x40] sm:$0xff]
        %v224 = vld [vmem:[%s1 + $0x48] sm:$0xff]
        %v225 = vld [vmem:[%s1 + $0x50] sm:$0xff]
        %v226 = vld [vmem:[%s1 + $0x58] sm:$0xff]
        %v227 = vld [vmem:[%s1 + $0x60] sm:$0xff]
        %v228 = vld [vmem:[%s1 + $0x68] sm:$0xff]
        %v229 = vld [vmem:[%s1 + $0x70] sm:$0xff]
        %v230 = vld [vmem:[%s1 + $0x78] sm:$0xff]
        %v231 = vld [vmem:[%s1 + $0x80] sm:$0xff]
        %v232 = vld [vmem:[%s1 + $0x88] sm:$0xff]
        %v233 = vld [vmem:[%s1 + $0x90] sm:$0xff]
        %v234 = vld [vmem:[%s1 + $0x98] sm:$0xff]
        %v235 = vld [vmem:[%s1 + $0xa0] sm:$0xff]
        %v236 = vld [vmem:[%s1 + $0xa8] sm:$0xff]
        %v237 = vld [vmem:[%s1 + $0xb0] sm:$0xff]
        %v238 = vld [vmem:[%s1 + $0xb8] sm:$0xff]
        %v239 = vld [vmem:[%s1 + $0xc0] sm:$0xff]
        %v240 = vld [vmem:[%s1 + $0xc8] sm:$0xff]
        %v241 = vld [vmem:[%s1 + $0xd0] sm:$0xff]
        %v242 = vld [vmem:[%s1 + $0xd8] sm:$0xff]
        %v243 = vld [vmem:[%s1 + $0xe0] sm:$0xff]
        %v244 = vld [vmem:[%s1 + $0xe8] sm:$0xff]
        %v245 = vld [vmem:[%s1 + $0xf0] sm:$0xff]
        %v246 = vld [vmem:[%s1 + $0xf8] sm:$0xff]
        %v247 = vld [vmem:[%s213] sm:$0xf]
        %v249 = vcombine.high %v214, %v214
        %251 = vmatprep.subr.mxu0 0.0
        %252 = vmatpush1.msra.mxu0 %v215
        %253 = vmatprep.subr.mxu0 0.0
        %254 = vmatpush1.msra.mxu0 %v216
        %255 = vmatprep.subr.mxu0 0.0
        %256 = vmatpush1.msra.mxu0 %v217
        %257 = vmatprep.subr.mxu0 0.0
        %258 = vmatpush1.msra.mxu0 %v218
        %259 = vmatprep.subr.mxu0 0.0
        %260 = vmatpush1.msra.mxu0 %v219
        %261 = vmatprep.subr.mxu0 0.0
        %262 = vmatpush1.msra.mxu0 %v220
        %263 = vmatprep.subr.mxu0 0.0
        %264 = vmatpush1.msra.mxu0 %v221
        %265 = vmatprep.subr.mxu0 0.0
        %266 = vmatpush1.msra.mxu0 %v222
        %267 = vmatprep.subr.mxu0 0.0
        %268 = vmatpush1.msra.mxu0 %v223
        %269 = vmatprep.subr.mxu0 0.0
        %270 = vmatpush1.msra.mxu0 %v224
        %271 = vmatprep.subr.mxu0 0.0
        %272 = vmatpush1.msra.mxu0 %v225
        %273 = vmatprep.subr.mxu0 0.0
        %274 = vmatpush1.msra.mxu0 %v226
        %275 = vmatprep.subr.mxu0 0.0
        %276 = vmatpush1.msra.mxu0 %v227
        %277 = vmatprep.subr.mxu0 0.0
        %278 = vmatpush1.msra.mxu0 %v228
        %279 = vmatprep.subr.mxu0 0.0
        %280 = vmatpush1.msra.mxu0 %v229
        %281 = vmatprep.subr.mxu0 0.0
        %282 = vmatpush1.msra.mxu0 %v230
        %283 = vmatprep.subr.mxu0 0.0
        %284 = vmatpush1.msra.mxu0 %v231
        %285 = vmatprep.subr.mxu0 0.0
        %286 = vmatpush1.msra.mxu0 %v232
        %287 = vmatprep.subr.mxu0 0.0
        %288 = vmatpush1.msra.mxu0 %v233
        %289 = vmatprep.subr.mxu0 0.0
        %290 = vmatpush1.msra.mxu0 %v234
        %291 = vmatprep.subr.mxu0 0.0
        %292 = vmatpush1.msra.mxu0 %v235
        %293 = vmatprep.subr.mxu0 0.0
        %294 = vmatpush1.msra.mxu0 %v236
        %295 = vmatprep.subr.mxu0 0.0
        %296 = vmatpush1.msra.mxu0 %v237
        %297 = vmatprep.subr.mxu0 0.0
        %298 = vmatpush1.msra.mxu0 %v238
        %299 = vmatprep.subr.mxu0 0.0
        %300 = vmatpush1.msra.mxu0 %v239
        %301 = vmatprep.subr.mxu0 0.0
        %302 = vmatpush1.msra.mxu0 %v240
        %303 = vmatprep.subr.mxu0 0.0
        %304 = vmatpush1.msra.mxu0 %v241
        %305 = vmatprep.subr.mxu0 0.0
        %306 = vmatpush1.msra.mxu0 %v242
        %307 = vmatprep.subr.mxu0 0.0
        %308 = vmatpush1.msra.mxu0 %v243
        %309 = vmatprep.subr.mxu0 0.0
        %310 = vmatpush1.msra.mxu0 %v244
        %311 = vmatprep.subr.mxu0 0.0
        %312 = vmatpush1.msra.mxu0 %v245
        %313 = vmatprep.subr.mxu0 0.0
        %314 = vmatpush1.msra.mxu0 %v246
        %315 = vmatprep.mubr.f32.mxu0 %v249
        %316 = vmatmul.mubr.f32.gmra.mrb[0].mxu0 %v214
        %v317 = vpop.f32.mrb[0].mxu0
        %v318 = vadd.f32 %v247, %v317
        %v319 = vpop.f32.mrb[0].mxu0
        %320 = vdwg.mxu0
        %321 = vst [vmem:[%s200] sm:$0xf] %v318
        %s322 = sand.u32 %s114, 1
        %s323 = scalar_lea.sflag [#allocation3], %s322
        %s324 = sand.u32 %s114, 1
        %s325 = smul.addr %s324, 4
        %s326 = scalar_lea.vmem [#allocation2], %s325
        // Predicated region
        $region33: #{patch_embed_forward.1} parent=31 // pred_check
          %p327 = pneg %p124
        $region34: #{patch_embed_forward.1} parent=31 // pred_check_branch
          %329 = sbr.rel (%p327) target = $region36
        $region35: #{patch_embed_forward.1} parent=31 // pred_region
          %s331 = ssub.s32 64, 64
          %332 = vsyncadd %s323, %s331
          %s333 = sadd.s32 %s21, %s22
          %s334 = smul.addr %s333, 64
          %s335 = scalar_lea.hbm %s3, %s334
          %s337 = sshll.u32 %s326, 4
          %s338 = int_to_ptr.vmem [resolvable:$true] %s337
          %340 = dma.vmem_to_hbm [thread:$0]  %s338, 64, %s335, %s323
        $region36: #{patch_embed_forward.1} parent=31 // pred_fallthru
          _
      $region32: #{patch_embed_forward.1} parent=5 // pred_fallthru
        _
      %p341 = scmp.le.s32.totalorder 2, %s12
      // Predicated region
      $region37: #{patch_embed_forward.1} parent=5 // pred_check
        %p342 = pneg %p341
      $region38: #{patch_embed_forward.1} parent=5 // pred_check_branch
        %344 = sbr.rel (%p342) target = $region40
      $region39: #{patch_embed_forward.1} parent=5 // pred_region
        %s345 = ssub.s32 %s12, 2
        // Predicated region
        $region41: #{patch_embed_forward.1} parent=39 // pred_check
          %p346 = pneg %p130
        $region42: #{patch_embed_forward.1} parent=39 // pred_check_branch
          %348 = sbr.rel (%p346) target = $region44
        $region43: #{patch_embed_forward.1} parent=39 // pred_region
          %s349 = sand.u32 %s115, 1
          %s350 = scalar_lea.sflag [#allocation3], %s349
          %s351 = sand.u32 %s115, 1
          %s352 = smul.addr %s351, 4
          %s353 = scalar_lea.vmem [#allocation2], %s352
          %354 = dma.done %s350, 64
        $region44: #{patch_embed_forward.1} parent=39 // pred_fallthru
          _
      $region40: #{patch_embed_forward.1} parent=5 // pred_fallthru
        _
    $region6: #{patch_embed_forward.1} parent=1 // loop_footer
      %s16 = sadd.s32 1, %s12
    $region7: #{patch_embed_forward.1} parent=1 // loop_footer_branch
      %11 = sbr.rel target = $region3
    $region8: #{patch_embed_forward.1} parent=1 // loop_exit
      _
    %355 = vsyncpa [#allocation3], 1
    %s356 = scalar_lea.sflag [#allocation3], 1
    %357 = vsyncpa %s356, 1

</llo_original>
